<compile_context>
chip_gen: v6e
topology: v6e:2x2x1
jax: 0.10.0
libtpu: 0.0.40
codegen_flags: <defaults>
</compile_context>

<pallas_src>
import functools

import jax
import jax.numpy as jnp
from jax.experimental import pallas as pl
from jax.experimental.pallas import tpu as pltpu


def _biasfree_ln_kernel(x_ref, w_ref, o_ref, *, eps, inv_c):
    """x_ref/o_ref: (C, T) tile (C on sublanes, T = H*W chunk on lanes).
    w_ref: (C, 1) weight column.

    Centered two-pass biased variance (numerically safe, var >= 0 by
    construction) -> rsqrt on the EUP -> scale.  x itself is NOT mean-centered
    (BiasFree semantics).

    NOTE: lanes are fully independent; a ragged last H*W tile may read garbage
    in its padded lanes, but those lanes are masked on store.  Do not add any
    cross-lane (axis=-1) work without revisiting this invariant.
    """
    x = x_ref[...].astype(jnp.float32)                       # (C, T)
    w = w_ref[...].astype(jnp.float32)                       # (C, 1)
    mu = jnp.sum(x, axis=0, keepdims=True) * inv_c           # (1, T) sublane reduce
    d = x - mu
    var = jnp.sum(d * d, axis=0, keepdims=True) * inv_c      # biased (ddof=0), >= 0
    inv = jax.lax.rsqrt(var + eps)                           # (1, T), EUP
    o_ref[...] = ((x * inv) * w).astype(o_ref.dtype)


def _vmem_capacity_bytes():
    try:
        return int(pltpu.get_tpu_info().vmem_capacity_bytes)
    except Exception:
        return 64 * 1024 * 1024  # conservative default (v7x-sized VMEM)


def _pick_tile_hw(hw, c, itemsize, target_bytes):
    """Largest lane-dense (multiple-of-128) tile of H*W whose *input* block is
    ~target_bytes; full extent when H*W fits in one block.  Full-dim blocks are
    legal even when H*W < 128 (tiny feature maps accept masked stores)."""
    if hw <= 128:
        return hw
    tile = (target_bytes // max(1, c * itemsize)) // 128 * 128
    tile = max(128, tile)
    return hw if hw <= tile else tile


def biasfree_layernorm_nchw(x_nchw, weight, *, eps=1e-5, tile_hw=None):
    """x_nchw: (B, C, H, W); weight: (C,).

    Normalizes over C (the axis the PyTorch module sees as its last axis after
    mca.py's NCHW -> (B, HW, C) rearrange) with biased variance and eps inside
    the sqrt, without subtracting the mean from x.  Input/output stay in the
    caller's dtype; compute is f32.
    """
    b, c, h, w = x_nchw.shape
    hw = h * w
    x3 = x_nchw.reshape(b, c, hw)                 # layout-preserving, no copy
    w2 = weight.reshape(c, 1)
    itemsize = jnp.dtype(x_nchw.dtype).itemsize

    # Per-generation block sizing: big-VMEM chips (v5e/v6e, 128 MiB) take
    # ~4 MiB blocks; v7x (64 MiB physical / 32 MiB scoped) stays at ~2 MiB so
    # double-buffered in+out tiles plus f32 intermediates fit comfortably.
    vmem_cap = _vmem_capacity_bytes()
    big_vmem = vmem_cap >= 96 * 1024 * 1024
    target_bytes = (4 if big_vmem else 2) * 1024 * 1024
    if tile_hw is None:
        tile_hw = _pick_tile_hw(hw, c, itemsize, target_bytes)

    grid = (b, pl.cdiv(hw, tile_hw))
    vmem_limit = (64 if big_vmem else 32) * 1024 * 1024

    cost = pl.CostEstimate(
        flops=6 * b * c * hw,
        transcendentals=b * hw,
        bytes_accessed=2 * b * c * hw * itemsize
        + c * jnp.dtype(weight.dtype).itemsize,
    )

    out = pl.pallas_call(
        functools.partial(_biasfree_ln_kernel, eps=eps, inv_c=1.0 / c),
        out_shape=jax.ShapeDtypeStruct((b, c, hw), x_nchw.dtype),
        grid_spec=pl.GridSpec(
            grid=grid,
            in_specs=[
                # Leading batch dim squeezed -> kernel sees a 2-D (C, T) ref.
                pl.BlockSpec((None, c, tile_hw), lambda bi, ti: (bi, 0, ti)),
                pl.BlockSpec((c, 1), lambda bi, ti: (0, 0)),
            ],
            out_specs=pl.BlockSpec((None, c, tile_hw), lambda bi, ti: (bi, 0, ti)),
        ),
        compiler_params=pltpu.CompilerParams(
            # Both axes independent -> megacore sharding on v7x's 2 TensorCores.
            # TODO(synk): if profiling ever shows one v7x core idle, switch the
            # H*W-tile axis to pltpu.CORE_PARALLEL (or pl.core_map) for an
            # explicit core split; also worth sweeping pipeline_mode=
            # pl.Buffered(3) on the data BlockSpecs on v7x.
            dimension_semantics=("parallel", "parallel"),
            vmem_limit_bytes=vmem_limit,
        ),
        cost_estimate=cost,
    )(x3, w2)
    return out.reshape(b, c, h, w)


if __name__ == "__main__":
    key = jax.random.PRNGKey(0)
    B, C, H, W = 2, 4, 16, 16
    # Non-zero mean stresses the variance path (the old one-pass formula could
    # cancel here); the centered two-pass handles it exactly like jnp.var.
    x = jax.random.normal(key, (B, C, H, W), dtype=jnp.float32) + 3.0

    # nn.Parameter(torch.ones(normalized_shape)) -> deterministic ones(C)
    weight = jnp.ones((C,), dtype=jnp.float32)

    out = jax.block_until_ready(biasfree_layernorm_nchw(x, weight))

    # Pure-JAX reference: biased variance over C, eps inside sqrt, no mean sub.
    var = jnp.var(x, axis=1, keepdims=True)                  # ddof=0 (biased)
    ref = x / jnp.sqrt(var + 1e-5) * weight[None, :, None, None]

    assert out.shape == x.shape and out.dtype == x.dtype
    assert jnp.allclose(out, ref, atol=1e-5, rtol=1e-5)

    # Ragged last tile: H*W = 180 with a forced 128-lane tile -> cdiv grid,
    # masked store on the last block.
    x2 = jax.random.normal(jax.random.PRNGKey(1), (2, 4, 18, 10), dtype=jnp.float32)
    out2 = jax.block_until_ready(biasfree_layernorm_nchw(x2, weight, tile_hw=128))
    var2 = jnp.var(x2, axis=1, keepdims=True)
    ref2 = x2 / jnp.sqrt(var2 + 1e-5) * weight[None, :, None, None]
    assert jnp.allclose(out2, ref2, atol=1e-5, rtol=1e-5)

    print("KERNEL_OK")
</pallas_src>

<mosaic_0001>
module attributes {stable_mosaic.version = 11 : i64} {
  func.func @_biasfree_ln_kernel(%arg0: i32, %arg1: i32, %arg2: memref<1x4x256xf32, #tpu.memory_space<vmem>>, %arg3: memref<4x1xf32, #tpu.memory_space<vmem>>, %arg4: memref<1x4x256xf32, #tpu.memory_space<vmem>>) attributes {dimension_semantics = [#tpu.dimension_semantics<parallel>, #tpu.dimension_semantics<parallel>], iteration_bounds = array<i64: 2, 1>, scalar_prefetch = 0 : i64, scratch_operands = 0 : i64, tpu.core_type = #tpu.core_type<tc>, window_params = [{transform_indices = @transform_0, window_bounds = array<i64: 1, 4, 256>}, {pipeline_mode = #tpu.pipeline_mode<synchronous>, transform_indices = @transform_1, window_bounds = array<i64: 4, 1>}, {transform_indices = @transform_2, window_bounds = array<i64: 1, 4, 256>}]} {
    %c0 = arith.constant 0 : index
    %c0_0 = arith.constant 0 : index
    %c0_1 = arith.constant 0 : index
    %0 = vector.load %arg2[%c0, %c0_0, %c0_1] : memref<1x4x256xf32, #tpu.memory_space<vmem>>, vector<1x4x256xf32>
    %1 = vector.shape_cast %0 : vector<1x4x256xf32> to vector<4x256xf32>
    %c0_2 = arith.constant 0 : index
    %c0_3 = arith.constant 0 : index
    %2 = vector.load %arg3[%c0_2, %c0_3] : memref<4x1xf32, #tpu.memory_space<vmem>>, vector<4x1xf32>
    %cst = arith.constant dense<0.000000e+00> : vector<256xf32>
    %3 = vector.multi_reduction <add>, %1, %cst [0] : vector<4x256xf32> to vector<256xf32>
    %4 = vector.shape_cast %3 : vector<256xf32> to vector<1x256xf32>
    %cst_4 = arith.constant 2.500000e-01 : f32
    %5 = vector.broadcast %cst_4 : f32 to vector<1x256xf32>
    %6 = arith.mulf %4, %5 : vector<1x256xf32>
    %7 = vector.broadcast %6 : vector<1x256xf32> to vector<4x256xf32>
    %8 = arith.subf %1, %7 : vector<4x256xf32>
    %9 = arith.mulf %8, %8 : vector<4x256xf32>
    %cst_5 = arith.constant dense<0.000000e+00> : vector<256xf32>
    %10 = vector.multi_reduction <add>, %9, %cst_5 [0] : vector<4x256xf32> to vector<256xf32>
    %11 = vector.shape_cast %10 : vector<256xf32> to vector<1x256xf32>
    %cst_6 = arith.constant 2.500000e-01 : f32
    %12 = vector.broadcast %cst_6 : f32 to vector<1x256xf32>
    %13 = arith.mulf %11, %12 : vector<1x256xf32>
    %cst_7 = arith.constant 9.99999974E-6 : f32
    %14 = vector.broadcast %cst_7 : f32 to vector<1x256xf32>
    %15 = arith.addf %13, %14 : vector<1x256xf32>
    %16 = math.rsqrt %15 : vector<1x256xf32>
    %17 = vector.broadcast %16 : vector<1x256xf32> to vector<4x256xf32>
    %18 = arith.mulf %1, %17 : vector<4x256xf32>
    %19 = vector.broadcast %2 : vector<4x1xf32> to vector<4x256xf32>
    %20 = arith.mulf %18, %19 : vector<4x256xf32>
    %c0_8 = arith.constant 0 : index
    %c0_9 = arith.constant 0 : index
    %c0_10 = arith.constant 0 : index
    %21 = vector.load %arg4[%c0_8, %c0_9, %c0_10] : memref<1x4x256xf32, #tpu.memory_space<vmem>>, vector<1x4x256xf32>
    %22 = vector.shape_cast %21 : vector<1x4x256xf32> to vector<4x256xf32>
    %23 = vector.shape_cast %20 : vector<4x256xf32> to vector<1x4x256xf32>
    tpu.vector_store %arg4[%c0_8, %c0_9, %c0_10], %23 {strides = array<i32>} : memref<1x4x256xf32, #tpu.memory_space<vmem>>, vector<1x4x256xf32>,
    return
  }
  func.func @transform_0(%arg0: i32, %arg1: i32) -> (i32, i32, i32) {
    %c0_i32 = arith.constant 0 : i32
    %c0_i32_0 = arith.constant 0 : i32
    return %arg0, %c0_i32, %arg1 : i32, i32, i32
  }
  func.func @transform_1(%arg0: i32, %arg1: i32) -> (i32, i32) {
    %c0_i32 = arith.constant 0 : i32
    %c0_i32_0 = arith.constant 0 : i32
    %c0_i32_1 = arith.constant 0 : i32
    return %c0_i32, %c0_i32_0 : i32, i32
  }
  func.func @transform_2(%arg0: i32, %arg1: i32) -> (i32, i32, i32) {
    %c0_i32 = arith.constant 0 : i32
    %c0_i32_0 = arith.constant 0 : i32
    return %arg0, %c0_i32, %arg1 : i32, i32, i32
  }
}

</mosaic_0001>

<llo_original>
// kernel: tpu_custom_call.1
$region0: #{tpu_custom_call.1}
  #allocation0 [shape = 'u32[]', space=smem, size = 0x4, offset = 0x4, fixed_abs, tag = 'smem constant byte address 0x4 - core index']
  #allocation1 [shape = 'u32[144,128]{1,0:T(1,128)}', space=vmem, size = 0x12000, scoped, tag = 'internal scratch']
  %s0 = inlined_call_operand.hbm [shape: f32[2,4,256], index: 0, kind: input, shape index: {}]
  %s1 = inlined_call_operand.vmem [shape: f32[4,1], index: 1, kind: input, shape index: {}]
  %s2 = inlined_call_operand.hbm [shape: f32[2,4,256], index: 2, kind: output, shape index: {}]
  %s3 = sld [smem:[#allocation0]]
  $region45: #{tpu_custom_call.1} parent=0
    _
  %s5 = ssub.s32 1, %s3
  %s6 = scalar_select 0, %s5, %s3
  $region1: #{tpu_custom_call.1} parent=0
    #allocation2 [shape = 'u8[8192]{0}', space=vmem, size = 0x2000, scoped, tag = 'input window, operand 0']
    #allocation3 [shape = 's32[2]{0}', space=sflag, size = 0x8, scoped, tag = 'scoped memory for tpu_custom_call.1']
    #allocation4 [shape = 's32[2]{0}', space=sflag, size = 0x8, scoped, tag = 'scoped memory for tpu_custom_call.1']
    #allocation5 [shape = 'u8[8192]{0}', space=vmem, size = 0x2000, scoped, tag = 'output window, operand 0']
    %7 = vsyncpa [#allocation3], 0
    %s8 = scalar_lea.sflag [#allocation3], 1
    %9 = vsyncpa %s8, 0
    %10 = vsyncpa [#allocation4], 0
    %s11 = scalar_lea.sflag [#allocation4], 1
    %12 = vsyncpa %s11, 0
    loop: start=0, step=1, limit=4
    $region2: #{tpu_custom_call.1} parent=1 // loop_pre_header
      _
    $region3: #{tpu_custom_call.1} parent=1 // loop_header
      %s14 = sphi 0, %s18
      %p15 = scmp.ge.s32.totalorder %s14, 4
      %s21 = sphi 0, %s33
      %s22 = sphi 0, %s29
      %s23 = sphi 0, %s21
      %s24 = sphi 0, %s22
      %s25 = sphi 0, %s23
      %s26 = sphi 0, %s24
      %s38 = sphi 0, %s40
      %s41 = sphi 0, %s38
      %s42 = sphi 0, %s41
      %s58 = sphi 0, %s42
      %s62 = sphi 0, %s62
      %s64 = sphi 0, %s62
      %s65 = sphi 0, %s64
      %s79 = sphi 0, %s65
      %s87 = sphi 0, %s89
      %s90 = sphi 0, %s87
      %s91 = sphi 0, %s90
      %s107 = sphi 0, %s91
    $region4: #{tpu_custom_call.1} parent=1 // loop_header_branch
      %17 = sbr.rel (%p15) target = $region8
    $region5: #{tpu_custom_call.1} parent=1 // loop_body
      %s19 = ssub.s32 %s14, 1
      %s20 = ssub.s32 %s14, 2
      %s27 = sadd.s32 1, %s22
      %p28 = scmp.ge.s32.totalorder %s27, 1
      %s29 = scalar_select %p28, 0, %s27
      %s30 = sadd.s32 1, %s21
      %s31 = scalar_select %p28, %s30, %s21
      %p32 = scmp.ge.s32.totalorder %s31, 2
      %s33 = scalar_select %p32, 0, %s31
      %s34 = ssub.s32 %s21, %s33
      %s35 = ssub.s32 %s22, %s29
      %s36 = sor.u32 %s34, %s35
      %p37 = scmp.eq.s32.totalorder %s36, 0
      %s39 = sadd.s32 %s38, 1
      %s40 = scalar_select %p37, %s38, %s39
      %p43 = pneg %p37
      %p44 = scmp.eq.s32.totalorder %s14, 1
      %p45 = por %p43, %p44
      %p46 = scmp.ne.s32.totalorder %s38, %s41
      %p47 = scmp.eq.s32.totalorder %s14, 0
      %p48 = por %p46, %p47
      %p49 = scmp.ne.s32.totalorder %s38, %s41
      %p50 = scmp.eq.s32.totalorder %s19, 1
      %p51 = por %p49, %p50
      %p52 = scmp.ne.s32.totalorder %s41, %s42
      %p53 = scmp.eq.s32.totalorder %s19, 0
      %p54 = por %p52, %p53
      %p55 = scmp.ne.s32.totalorder %s41, %s42
      %p56 = scmp.eq.s32.totalorder %s20, 1
      %p57 = por %p55, %p56
      %p59 = scmp.ne.s32.totalorder %s42, %s58
      %p60 = scmp.eq.s32.totalorder %s20, 0
      %p61 = por %p59, %p60
      %s63 = sadd.s32 %s62, 1
      %p66 = scmp.eq.s32.totalorder %s14, 1
      %p67 = scmp.ne.s32.totalorder %s62, %s64
      %p68 = scmp.eq.s32.totalorder %s14, 0
      %p69 = por %p67, %p68
      %p70 = scmp.ne.s32.totalorder %s62, %s64
      %p71 = scmp.eq.s32.totalorder %s19, 1
      %p72 = por %p70, %p71
      %p73 = scmp.ne.s32.totalorder %s64, %s65
      %p74 = scmp.eq.s32.totalorder %s19, 0
      %p75 = por %p73, %p74
      %p76 = scmp.ne.s32.totalorder %s64, %s65
      %p77 = scmp.eq.s32.totalorder %s20, 1
      %p78 = por %p76, %p77
      %p80 = scmp.ne.s32.totalorder %s65, %s79
      %p81 = scmp.eq.s32.totalorder %s20, 0
      %p82 = por %p80, %p81
      %s83 = ssub.s32 %s21, %s33
      %s84 = ssub.s32 %s22, %s29
      %s85 = sor.u32 %s83, %s84
      %p86 = scmp.eq.s32.totalorder %s85, 0
      %s88 = sadd.s32 %s87, 1
      %s89 = scalar_select %p86, %s87, %s88
      %p92 = pneg %p86
      %p93 = scmp.eq.s32.totalorder %s14, 1
      %p94 = por %p92, %p93
      %p95 = scmp.ne.s32.totalorder %s87, %s90
      %p96 = scmp.eq.s32.totalorder %s14, 0
      %p97 = por %p95, %p96
      %p98 = scmp.ne.s32.totalorder %s87, %s90
      %p99 = scmp.eq.s32.totalorder %s19, 1
      %p100 = por %p98, %p99
      %p101 = scmp.ne.s32.totalorder %s90, %s91
      %p102 = scmp.eq.s32.totalorder %s19, 0
      %p103 = por %p101, %p102
      %p104 = scmp.ne.s32.totalorder %s90, %s91
      %p105 = scmp.eq.s32.totalorder %s20, 1
      %p106 = por %p104, %p105
      %p108 = scmp.ne.s32.totalorder %s91, %s107
      %p109 = scmp.eq.s32.totalorder %s20, 0
      %p110 = por %p108, %p109
      %p111 = scmp.le.s32.totalorder 1, %s14
      %p112 = scmp.lt.s32.totalorder %s14, 3
      %p113 = pnand %p111, %p112
      %p114 = pneg %p113
      // Predicated region
      $region9: #{tpu_custom_call.1} parent=5 // pred_check
        _
      $region10: #{tpu_custom_call.1} parent=5 // pred_check_branch
        %116 = sbr.rel (%p113) target = $region12
      $region11: #{tpu_custom_call.1} parent=5 // pred_region
        %s117 = ssub.s32 %s14, 1
        // Predicated region
        $region13: #{tpu_custom_call.1} parent=11 // pred_check
          %p118 = pneg %p75
        $region14: #{tpu_custom_call.1} parent=11 // pred_check_branch
          %120 = sbr.rel (%p118) target = $region16
        $region15: #{tpu_custom_call.1} parent=11 // pred_region
          _
        $region16: #{tpu_custom_call.1} parent=11 // pred_fallthru
          _
      $region12: #{tpu_custom_call.1} parent=5 // pred_fallthru
        _
      %p121 = scmp.lt.s32.totalorder %s14, 2
      // Predicated region
      $region17: #{tpu_custom_call.1} parent=5 // pred_check
        %p122 = pneg %p121
      $region18: #{tpu_custom_call.1} parent=5 // pred_check_branch
        %124 = sbr.rel (%p122) target = $region20
      $region19: #{tpu_custom_call.1} parent=5 // pred_region
        // Predicated region
        $region21: #{tpu_custom_call.1} parent=19 // pred_check
          %p125 = pneg %p48
        $region22: #{tpu_custom_call.1} parent=19 // pred_check_branch
          %127 = sbr.rel (%p125) target = $region24
        $region23: #{tpu_custom_call.1} parent=19 // pred_region
          %s128 = sand.u32 %s38, 1
          %s129 = scalar_lea.sflag [#allocation3], %s128
          %s130 = sand.u32 %s38, 1
          %s131 = smul.addr %s130, 8
          %s132 = scalar_lea.vmem [#allocation2], %s131
          %s133 = smul.u32 2, %s22
          %s135 = ssub.s32 128, 128
          %136 = vsyncadd %s129, %s135
          %s137 = smul.addr %s21, 2
          %s138 = sadd.s32 %s133, %s137
          %s139 = smul.addr %s138, 64
          %s140 = scalar_lea.hbm %s0, %s139
          %s142 = sshll.u32 %s132, 4
          %s143 = int_to_ptr.vmem [resolvable:$true] %s142
          %145 = dma.hbm_to_vmem [thread:$0]  %s140, 128, %s143, %s129
        $region24: #{tpu_custom_call.1} parent=19 // pred_fallthru
          _
      $region20: #{tpu_custom_call.1} parent=5 // pred_fallthru
        _
      %p146 = scmp.le.s32.totalorder 1, %s14
      %p147 = scmp.lt.s32.totalorder %s14, 3
      %p148 = pnand %p146, %p147
      %p149 = pneg %p148
      // Predicated region
      $region25: #{tpu_custom_call.1} parent=5 // pred_check
        _
      $region26: #{tpu_custom_call.1} parent=5 // pred_check_branch
        %151 = sbr.rel (%p148) target = $region28
      $region27: #{tpu_custom_call.1} parent=5 // pred_region
        %s152 = ssub.s32 %s14, 1
        %s153 = sand.u32 %s41, 1
        %s154 = scalar_lea.sflag [#allocation3], %s153
        %s155 = sand.u32 %s41, 1
        %s156 = smul.addr %s155, 8
        %s157 = scalar_lea.vmem [#allocation2], %s156
        // Predicated region
        $region29: #{tpu_custom_call.1} parent=27 // pred_check
          %p158 = pneg %p54
        $region30: #{tpu_custom_call.1} parent=27 // pred_check_branch
          %160 = sbr.rel (%p158) target = $region32
        $region31: #{tpu_custom_call.1} parent=27 // pred_region
          %161 = dma.done %s154, 128
        $region32: #{tpu_custom_call.1} parent=27 // pred_fallthru
          _
        %s162 = sand.u32 %s41, 1
        %s163 = scalar_lea.sflag [#allocation3], %s162
        %s164 = sand.u32 %s41, 1
        %s165 = smul.addr %s164, 8
        %s166 = scalar_lea.vmem [#allocation2], %s165
        %p167 = pneg %p54
        %p168 = pneg %p51
        %p169 = pneg %p75
        %p170 = pneg %p72
        %p171 = pneg %p103
        %p172 = pneg %p100
        %s173 = sand.u32 %s90, 1
        %s174 = scalar_lea.sflag [#allocation4], %s173
        %s175 = sand.u32 %s90, 1
        %s176 = smul.addr %s175, 8
        %s177 = scalar_lea.vmem [#allocation5], %s176
        %s178 = smul.u32 2, %s24
        %s179 = smul.u32 2, %s24
        %v180 = vld [vmem:[%s157] sm:$0xff]
        %v181 = vld [vmem:[%s1] sm:$0xf]
        %v183 = vcombine.high %v180, %v180
        %vm185 = vcmask 1043456
        %v186 = vsel %vm185, %v180, 0.0
        %v187 = vrot.slane %v186, 4
        %v188 = vadd.f32 %v186, %v187
        %v189 = vrot.slane %v188, 2
        %v190 = vadd.f32 %v188, %v189
        %v191 = vrot.slane %v190, 1
        %v192 = vadd.f32 %v190, %v191
        %v193 = vsel %vm185, %v183, 0.0
        %v194 = vrot.slane %v193, 4
        %v195 = vadd.f32 %v193, %v194
        %v196 = vrot.slane %v195, 2
        %v197 = vadd.f32 %v195, %v196
        %v198 = vrot.slane %v197, 1
        %v199 = vadd.f32 %v197, %v198
        %v200 = vmul.f32 %v192, 0.25
        %v201 = vmul.f32 %v199, 0.25
        %v204 = vcombine.low %v200, %v201
        %v206 = vsub.f32 %v180, %v204
        %v207 = vmul.f32 %v206, %v206
        %v209 = vcombine.high %v207, %v207
        %v211 = vsel %vm185, %v207, 0.0
        %v212 = vrot.slane %v211, 4
        %v213 = vadd.f32 %v211, %v212
        %v214 = vrot.slane %v213, 2
        %v215 = vadd.f32 %v213, %v214
        %v216 = vrot.slane %v215, 1
        %v217 = vadd.f32 %v215, %v216
        %v218 = vsel %vm185, %v209, 0.0
        %v219 = vrot.slane %v218, 4
        %v220 = vadd.f32 %v218, %v219
        %v221 = vrot.slane %v220, 2
        %v222 = vadd.f32 %v220, %v221
        %v223 = vrot.slane %v222, 1
        %v224 = vadd.f32 %v222, %v223
        %v225 = vmul.f32 %v217, 0.25
        %v226 = vmul.f32 %v224, 0.25
        %v227 = vadd.f32 %v225, 1e-05
        %v228 = vadd.f32 %v226, 1e-05
        %v229 = vrsqrt.pop %v227
        %v230 = vrsqrt.pop %v228
        %v233 = vcombine.low %v229, %v230
        %v235 = vmul.f32 %v180, %v233
        %237 = vset.pattern.permute.xlu0 0
        %238 = vperm.xlu0 %237, %v181
        %v239 = vpop.permute.xlu0 %238
        %v241 = vunpack.c.l.s4 839922192
        %v242 = vunpack.c.0.s8 %v241
        %v243 = vlaneseq
        %v244 = vshrl.u32 %v243, 7
        %v245 = vsub.s32 %v242, %v244
        %v246 = vrot.slane %v239, %v245
        %v248 = vmul.f32 %v235, %v246
        %249 = vst [vmem:[%s177] sm:$0xff] %v248
        %s250 = sand.u32 %s90, 1
        %s251 = scalar_lea.sflag [#allocation4], %s250
        %s252 = sand.u32 %s90, 1
        %s253 = smul.addr %s252, 8
        %s254 = scalar_lea.vmem [#allocation5], %s253
        // Predicated region
        $region33: #{tpu_custom_call.1} parent=27 // pred_check
          %p255 = pneg %p100
        $region34: #{tpu_custom_call.1} parent=27 // pred_check_branch
          %257 = sbr.rel (%p255) target = $region36
        $region35: #{tpu_custom_call.1} parent=27 // pred_region
          %s258 = smul.u32 2, %s24
          %s260 = ssub.s32 128, 128
          %261 = vsyncadd %s251, %s260
          %s262 = smul.addr %s23, 2
          %s263 = sadd.s32 %s258, %s262
          %s264 = smul.addr %s263, 64
          %s265 = scalar_lea.hbm %s2, %s264
          %s267 = sshll.u32 %s254, 4
          %s268 = int_to_ptr.vmem [resolvable:$true] %s267
          %270 = dma.vmem_to_hbm [thread:$0]  %s268, 128, %s265, %s251
        $region36: #{tpu_custom_call.1} parent=27 // pred_fallthru
          _
      $region28: #{tpu_custom_call.1} parent=5 // pred_fallthru
        _
      %p271 = scmp.le.s32.totalorder 2, %s14
      // Predicated region
      $region37: #{tpu_custom_call.1} parent=5 // pred_check
        %p272 = pneg %p271
      $region38: #{tpu_custom_call.1} parent=5 // pred_check_branch
        %274 = sbr.rel (%p272) target = $region40
      $region39: #{tpu_custom_call.1} parent=5 // pred_region
        %s275 = ssub.s32 %s14, 2
        // Predicated region
        $region41: #{tpu_custom_call.1} parent=39 // pred_check
          %p276 = pneg %p106
        $region42: #{tpu_custom_call.1} parent=39 // pred_check_branch
          %278 = sbr.rel (%p276) target = $region44
        $region43: #{tpu_custom_call.1} parent=39 // pred_region
          %s279 = sand.u32 %s91, 1
          %s280 = scalar_lea.sflag [#allocation4], %s279
          %s281 = sand.u32 %s91, 1
          %s282 = smul.addr %s281, 8
          %s283 = scalar_lea.vmem [#allocation5], %s282
          %284 = dma.done %s280, 128
        $region44: #{tpu_custom_call.1} parent=39 // pred_fallthru
          _
      $region40: #{tpu_custom_call.1} parent=5 // pred_fallthru
        _
    $region6: #{tpu_custom_call.1} parent=1 // loop_footer
      %s18 = sadd.s32 1, %s14
    $region7: #{tpu_custom_call.1} parent=1 // loop_footer_branch
      %13 = sbr.rel target = $region3
    $region8: #{tpu_custom_call.1} parent=1 // loop_exit
      _
    %285 = vsyncpa [#allocation3], 1
    %s286 = scalar_lea.sflag [#allocation3], 1
    %287 = vsyncpa %s286, 1
    %288 = vsyncpa [#allocation4], 1
    %s289 = scalar_lea.sflag [#allocation4], 1
    %290 = vsyncpa %s289, 1

</llo_original>
